<compile_context>
chip_gen: v7x
topology: tpu7x:2x2x1
jax: 0.10.0
libtpu: 0.0.40
codegen_flags: <defaults>
</compile_context>

<pallas_src>
import functools

import jax
import jax.numpy as jnp
import numpy as np
from jax.experimental import pallas as pl
from jax.experimental.pallas import tpu as pltpu


def camera_init_loss_kernel(joint_ref, param_ref, out_ref, *, batch, has_depth):
    """joint_ref: [5*B+1, J]  rows = jx | jy | jz | gtx | gty | mask(dw^2)
       param_ref: [B, 16]     cols = fx*R0(3) | fy*R1(3) | R2(3) | fx*tx, fy*ty, tz | cx, cy | dlw*dz | pad
       out_ref:   [1, 1]      scalar loss."""
    B = batch
    jx = joint_ref[0:B, :]
    jy = joint_ref[B:2 * B, :]
    jz = joint_ref[2 * B:3 * B, :]
    gtx = joint_ref[3 * B:4 * B, :]
    gty = joint_ref[4 * B:5 * B, :]
    mask = joint_ref[5 * B:5 * B + 1, :]          # [1, J], broadcasts over batch

    p = param_ref[...]                             # [B, 16]

    # camera-frame coords; x/y rows of R and trans already scaled by fx/fy on the host.
    cx_s = p[:, 0:1] * jx + p[:, 1:2] * jy + p[:, 2:3] * jz + p[:, 9:10]
    cy_s = p[:, 3:4] * jx + p[:, 4:5] * jy + p[:, 5:6] * jz + p[:, 10:11]
    cz = p[:, 6:7] * jx + p[:, 7:8] * jy + p[:, 8:9] * jz + p[:, 11:12]

    # perspective divide (EUP reciprocal; approx=True would exceed the 1e-4 rtol with fx=500)
    inv_z = pl.reciprocal(cz, approx=False)
    img_x = cx_s * inv_z + p[:, 12:13]
    img_y = cy_s * inv_z + p[:, 13:14]

    # masked squared reprojection error; mask already carries data_weight^2
    ex = gtx - img_x
    ey = gty - img_y
    loss = jnp.sum((ex * ex + ey * ey) * mask)

    if has_depth:
        dz = p[:, 14:15]                           # dlw * (trans_z - trans_est_z), host-precomputed
        loss = loss + jnp.sum(dz * dz)

    out_ref[...] = jnp.broadcast_to(loss, (1, 1)).astype(out_ref.dtype)


def smplify_camera_init_loss(joints, rotation, translation, focal_x, focal_y,
                             center, gt_joints, init_joints_idxs,
                             trans_estimation=None,
                             data_weight=1.0, depth_loss_weight=100.0):
    """Pallas-backed equivalent of SMPLifyCameraInitLoss.forward (+ perspective camera)."""
    joints = jnp.asarray(joints, jnp.float32)
    B, J, _ = joints.shape
    rot = jnp.asarray(rotation, jnp.float32).reshape(B, 9)
    trans = jnp.asarray(translation, jnp.float32)
    center = jnp.asarray(center, jnp.float32)
    gt = jnp.asarray(gt_joints, jnp.float32)

    idxs_np = np.asarray(init_joints_idxs)
    # The 0/dw^2 mask only matches torch.index_select when indices are distinct.
    assert len(np.unique(idxs_np)) == len(idxs_np), "init_joints_idxs must be distinct"

    fx = jnp.asarray(focal_x, jnp.float32)
    fy = jnp.asarray(focal_y, jnp.float32)
    one = jnp.ones((), jnp.float32)
    dw2 = jnp.asarray(data_weight, jnp.float32) ** 2

    # ---- packed joint slab: [5B+1, J]  (jx | jy | jz | gtx | gty | mask*dw^2) ----
    mask = jnp.zeros((1, J), jnp.float32).at[0, jnp.asarray(idxs_np)].set(dw2)
    joint_slab = jnp.concatenate(
        [joints[..., 0], joints[..., 1], joints[..., 2], gt[..., 0], gt[..., 1], mask],
        axis=0)

    # ---- packed per-batch parameter slab: [B, 16] ----
    row_scale = jnp.stack([fx, fx, fx, fy, fy, fy, one, one, one])     # scale R rows by fx/fy
    scaled_rot = rot * row_scale[None, :]
    scaled_trans = trans * jnp.stack([fx, fy, one])[None, :]

    has_depth = (trans_estimation is not None) and (float(depth_loss_weight) > 0)
    if has_depth:
        test = jnp.asarray(trans_estimation, jnp.float32)
        dlw = jnp.asarray(depth_loss_weight, jnp.float32)
        dz_scaled = (trans[:, 2:3] - test[:, 2:3]) * dlw               # dlw baked in
    else:
        dz_scaled = jnp.zeros((B, 1), jnp.float32)

    param_slab = jnp.concatenate(
        [scaled_rot, scaled_trans, center, dz_scaled, jnp.zeros((B, 1), jnp.float32)],
        axis=1)                                                         # [B, 16]

    kernel = functools.partial(camera_init_loss_kernel, batch=B, has_depth=has_depth)
    out = pl.pallas_call(
        kernel,
        out_shape=jax.ShapeDtypeStruct((1, 1), jnp.float32),
        in_specs=[pl.BlockSpec(memory_space=pltpu.MemorySpace.VMEM)] * 2,
        out_specs=pl.BlockSpec(memory_space=pltpu.MemorySpace.VMEM),
    )(joint_slab, param_slab)
    return out[0, 0]


def reference_loss(joints, rotation, translation, focal_x, focal_y, center,
                   gt_joints, init_joints_idxs, trans_estimation,
                   data_weight=1.0, depth_loss_weight=100.0):
    """Pure-JAX mirror of the PyTorch forward (smplifyx PerspectiveCamera + loss)."""
    p_cam = jnp.einsum('bki,bji->bjk', rotation, joints) + translation[:, None, :]
    img = p_cam[:, :, :2] / p_cam[:, :, 2:3]
    img = img * jnp.array([focal_x, focal_y], jnp.float32) + center[:, None, :]
    idxs = jnp.asarray(init_joints_idxs)
    joint_err = (gt_joints[:, idxs] - img[:, idxs]) ** 2
    joint_loss = jnp.sum(joint_err) * data_weight ** 2
    depth_loss = 0.0
    if depth_loss_weight > 0 and trans_estimation is not None:
        depth_loss = depth_loss_weight ** 2 * jnp.sum(
            (translation[:, 2] - trans_estimation[:, 2]) ** 2)
    return joint_loss + depth_loss


if __name__ == "__main__":
    key = jax.random.PRNGKey(0)
    B, J = 2, 16
    init_joints_idxs = np.array([0, 2, 5, 7, 9, 12], dtype=np.int32)

    k1, k2, k3, k4, k5 = jax.random.split(key, 5)
    joints = jax.random.normal(k1, (B, J, 3), jnp.float32) * 0.5            # body-model joints
    rotation = jnp.broadcast_to(jnp.eye(3, dtype=jnp.float32), (B, 3, 3))   # camera rotation
    translation = jnp.concatenate(                                          # camera translation (z > 0)
        [jax.random.normal(k2, (B, 2), jnp.float32) * 0.1,
         5.0 + jax.random.uniform(k3, (B, 1), jnp.float32)], axis=-1)
    focal_x = focal_y = 500.0
    center = jnp.full((B, 2), 50.0, jnp.float32)                            # principal point
    gt_joints = jax.random.normal(k4, (B, J, 2), jnp.float32) * 20.0 + 50.0
    trans_estimation = translation + jax.random.normal(k5, (B, 3), jnp.float32) * 0.05
    data_weight = 1.0
    depth_loss_weight = 100.0

    # with depth term
    loss = smplify_camera_init_loss(joints, rotation, translation, focal_x, focal_y,
                                    center, gt_joints, init_joints_idxs,
                                    trans_estimation, data_weight, depth_loss_weight)
    loss = jax.block_until_ready(loss)
    ref = reference_loss(joints, rotation, translation, focal_x, focal_y, center,
                         gt_joints, init_joints_idxs, trans_estimation,
                         data_weight, depth_loss_weight)
    np.testing.assert_allclose(np.asarray(loss), np.asarray(ref), rtol=1e-4, atol=1e-3)

    # without depth term (trans_estimation=None variant: depth path dropped at trace time)
    loss_nd = smplify_camera_init_loss(joints, rotation, translation, focal_x, focal_y,
                                       center, gt_joints, init_joints_idxs,
                                       None, data_weight, depth_loss_weight)
    loss_nd = jax.block_until_ready(loss_nd)
    ref_nd = reference_loss(joints, rotation, translation, focal_x, focal_y, center,
                            gt_joints, init_joints_idxs, None,
                            data_weight, depth_loss_weight)
    np.testing.assert_allclose(np.asarray(loss_nd), np.asarray(ref_nd), rtol=1e-4, atol=1e-3)

    print("KERNEL_OK")
</pallas_src>

<mosaic_0001>
module attributes {stable_mosaic.version = 11 : i64} {
  func.func @camera_init_loss_kernel(%arg0: memref<11x16xf32, #tpu.memory_space<vmem>>, %arg1: memref<2x16xf32, #tpu.memory_space<vmem>>, %arg2: memref<1x1xf32, #tpu.memory_space<vmem>>) attributes {dimension_semantics = [], scalar_prefetch = 0 : i64, scratch_operands = 0 : i64, tpu.core_type = #tpu.core_type<tc>} {
    %c0 = arith.constant 0 : index
    %c0_0 = arith.constant 0 : index
    %0 = vector.load %arg0[%c0, %c0_0] : memref<11x16xf32, #tpu.memory_space<vmem>>, vector<2x16xf32>
    %c2 = arith.constant 2 : index
    %c0_1 = arith.constant 0 : index
    %1 = vector.load %arg0[%c2, %c0_1] : memref<11x16xf32, #tpu.memory_space<vmem>>, vector<2x16xf32>
    %c4 = arith.constant 4 : index
    %c0_2 = arith.constant 0 : index
    %2 = vector.load %arg0[%c4, %c0_2] : memref<11x16xf32, #tpu.memory_space<vmem>>, vector<2x16xf32>
    %c6 = arith.constant 6 : index
    %c0_3 = arith.constant 0 : index
    %3 = vector.load %arg0[%c6, %c0_3] : memref<11x16xf32, #tpu.memory_space<vmem>>, vector<2x16xf32>
    %c8 = arith.constant 8 : index
    %c0_4 = arith.constant 0 : index
    %4 = vector.load %arg0[%c8, %c0_4] : memref<11x16xf32, #tpu.memory_space<vmem>>, vector<2x16xf32>
    %c10 = arith.constant 10 : index
    %c0_5 = arith.constant 0 : index
    %5 = vector.load %arg0[%c10, %c0_5] : memref<11x16xf32, #tpu.memory_space<vmem>>, vector<1x16xf32>
    %c0_6 = arith.constant 0 : index
    %c0_7 = arith.constant 0 : index
    %6 = vector.load %arg1[%c0_6, %c0_7] : memref<2x16xf32, #tpu.memory_space<vmem>>, vector<2x16xf32>
    %7 = vector.extract_strided_slice %6 {offsets = [0, 0], sizes = [2, 1], strides = [1, 1]} : vector<2x16xf32> to vector<2x1xf32>
    %8 = vector.broadcast %7 : vector<2x1xf32> to vector<2x16xf32>
    %9 = arith.mulf %8, %0 : vector<2x16xf32>
    %10 = vector.extract_strided_slice %6 {offsets = [0, 1], sizes = [2, 1], strides = [1, 1]} : vector<2x16xf32> to vector<2x1xf32>
    %11 = vector.broadcast %10 : vector<2x1xf32> to vector<2x16xf32>
    %12 = arith.mulf %11, %1 : vector<2x16xf32>
    %13 = arith.addf %9, %12 : vector<2x16xf32>
    %14 = vector.extract_strided_slice %6 {offsets = [0, 2], sizes = [2, 1], strides = [1, 1]} : vector<2x16xf32> to vector<2x1xf32>
    %15 = vector.broadcast %14 : vector<2x1xf32> to vector<2x16xf32>
    %16 = arith.mulf %15, %2 : vector<2x16xf32>
    %17 = arith.addf %13, %16 : vector<2x16xf32>
    %18 = vector.extract_strided_slice %6 {offsets = [0, 9], sizes = [2, 1], strides = [1, 1]} : vector<2x16xf32> to vector<2x1xf32>
    %19 = vector.broadcast %18 : vector<2x1xf32> to vector<2x16xf32>
    %20 = arith.addf %17, %19 : vector<2x16xf32>
    %21 = vector.extract_strided_slice %6 {offsets = [0, 3], sizes = [2, 1], strides = [1, 1]} : vector<2x16xf32> to vector<2x1xf32>
    %22 = vector.broadcast %21 : vector<2x1xf32> to vector<2x16xf32>
    %23 = arith.mulf %22, %0 : vector<2x16xf32>
    %24 = vector.extract_strided_slice %6 {offsets = [0, 4], sizes = [2, 1], strides = [1, 1]} : vector<2x16xf32> to vector<2x1xf32>
    %25 = vector.broadcast %24 : vector<2x1xf32> to vector<2x16xf32>
    %26 = arith.mulf %25, %1 : vector<2x16xf32>
    %27 = arith.addf %23, %26 : vector<2x16xf32>
    %28 = vector.extract_strided_slice %6 {offsets = [0, 5], sizes = [2, 1], strides = [1, 1]} : vector<2x16xf32> to vector<2x1xf32>
    %29 = vector.broadcast %28 : vector<2x1xf32> to vector<2x16xf32>
    %30 = arith.mulf %29, %2 : vector<2x16xf32>
    %31 = arith.addf %27, %30 : vector<2x16xf32>
    %32 = vector.extract_strided_slice %6 {offsets = [0, 10], sizes = [2, 1], strides = [1, 1]} : vector<2x16xf32> to vector<2x1xf32>
    %33 = vector.broadcast %32 : vector<2x1xf32> to vector<2x16xf32>
    %34 = arith.addf %31, %33 : vector<2x16xf32>
    %35 = vector.extract_strided_slice %6 {offsets = [0, 6], sizes = [2, 1], strides = [1, 1]} : vector<2x16xf32> to vector<2x1xf32>
    %36 = vector.broadcast %35 : vector<2x1xf32> to vector<2x16xf32>
    %37 = arith.mulf %36, %0 : vector<2x16xf32>
    %38 = vector.extract_strided_slice %6 {offsets = [0, 7], sizes = [2, 1], strides = [1, 1]} : vector<2x16xf32> to vector<2x1xf32>
    %39 = vector.broadcast %38 : vector<2x1xf32> to vector<2x16xf32>
    %40 = arith.mulf %39, %1 : vector<2x16xf32>
    %41 = arith.addf %37, %40 : vector<2x16xf32>
    %42 = vector.extract_strided_slice %6 {offsets = [0, 8], sizes = [2, 1], strides = [1, 1]} : vector<2x16xf32> to vector<2x1xf32>
    %43 = vector.broadcast %42 : vector<2x1xf32> to vector<2x16xf32>
    %44 = arith.mulf %43, %2 : vector<2x16xf32>
    %45 = arith.addf %41, %44 : vector<2x16xf32>
    %46 = vector.extract_strided_slice %6 {offsets = [0, 11], sizes = [2, 1], strides = [1, 1]} : vector<2x16xf32> to vector<2x1xf32>
    %47 = vector.broadcast %46 : vector<2x1xf32> to vector<2x16xf32>
    %48 = arith.addf %45, %47 : vector<2x16xf32>
    %49 = tpu.reciprocal %48 : vector<2x16xf32> -> vector<2x16xf32>
    %50 = arith.mulf %20, %49 : vector<2x16xf32>
    %51 = vector.extract_strided_slice %6 {offsets = [0, 12], sizes = [2, 1], strides = [1, 1]} : vector<2x16xf32> to vector<2x1xf32>
    %52 = vector.broadcast %51 : vector<2x1xf32> to vector<2x16xf32>
    %53 = arith.addf %50, %52 : vector<2x16xf32>
    %54 = arith.mulf %34, %49 : vector<2x16xf32>
    %55 = vector.extract_strided_slice %6 {offsets = [0, 13], sizes = [2, 1], strides = [1, 1]} : vector<2x16xf32> to vector<2x1xf32>
    %56 = vector.broadcast %55 : vector<2x1xf32> to vector<2x16xf32>
    %57 = arith.addf %54, %56 : vector<2x16xf32>
    %58 = arith.subf %3, %53 : vector<2x16xf32>
    %59 = arith.subf %4, %57 : vector<2x16xf32>
    %60 = arith.mulf %58, %58 : vector<2x16xf32>
    %61 = arith.mulf %59, %59 : vector<2x16xf32>
    %62 = arith.addf %60, %61 : vector<2x16xf32>
    %63 = vector.broadcast %5 : vector<1x16xf32> to vector<2x16xf32>
    %64 = arith.mulf %62, %63 : vector<2x16xf32>
    %65 = vector.shape_cast %64 : vector<2x16xf32> to vector<1x2x16xf32>
    %cst = arith.constant dense<0.000000e+00> : vector<1xf32>
    %66 = vector.multi_reduction <add>, %65, %cst [1, 2] : vector<1x2x16xf32> to vector<1xf32>
    %67 = vector.shape_cast %66 : vector<1xf32> to vector<1x1x1xf32>
    %68 = vector.extract %67[0, 0, 0] : f32 from vector<1x1x1xf32>
    %69 = vector.extract_strided_slice %6 {offsets = [0, 14], sizes = [2, 1], strides = [1, 1]} : vector<2x16xf32> to vector<2x1xf32>
    %70 = arith.mulf %69, %69 : vector<2x1xf32>
    %71 = vector.shape_cast %70 : vector<2x1xf32> to vector<1x2x1xf32>
    %cst_8 = arith.constant dense<0.000000e+00> : vector<1xf32>
    %72 = vector.multi_reduction <add>, %71, %cst_8 [1, 2] : vector<1x2x1xf32> to vector<1xf32>
    %73 = vector.shape_cast %72 : vector<1xf32> to vector<1x1x1xf32>
    %74 = vector.extract %73[0, 0, 0] : f32 from vector<1x1x1xf32>
    %75 = arith.addf %68, %74 : f32
    %76 = vector.broadcast %75 : f32 to vector<1x1xf32>
    %c0_9 = arith.constant 0 : index
    %c0_10 = arith.constant 0 : index
    %77 = vector.load %arg2[%c0_9, %c0_10] : memref<1x1xf32, #tpu.memory_space<vmem>>, vector<1x1xf32>
    tpu.vector_store %arg2[%c0_9, %c0_10], %76 {strides = array<i32>} : memref<1x1xf32, #tpu.memory_space<vmem>>, vector<1x1xf32>,
    return
  }
}

</mosaic_0001>

<llo_original>
// kernel: tpu_custom_call.1
$region0: #{tpu_custom_call.1}
  #allocation0 [shape = 'u32[]', space=smem, size = 0x4, offset = 0x4, fixed_abs, tag = 'smem constant byte address 0x4 - core index']
  #allocation1 [shape = 'u32[144,128]{1,0:T(1,128)}', space=vmem, size = 0x12000, scoped, tag = 'internal scratch']
  %s0 = inlined_call_operand.hbm [shape: f32[11,16], index: 0, kind: input, shape index: {}]
  %s1 = inlined_call_operand.vmem [shape: f32[2,16], index: 1, kind: input, shape index: {}]
  %s2 = inlined_call_operand.hbm [shape: f32[1,1], index: 2, kind: output, shape index: {}]
  %s3 = sld [smem:[#allocation0]]
  $region22: #{tpu_custom_call.1} parent=0
    _
  %s5 = ssub.s32 1, %s3
  %s6 = scalar_select 0, %s5, %s3
  $region1: #{tpu_custom_call.1} parent=0
    #allocation2 [shape = 'u8[8192]{0}', space=vmem, size = 0x2000, scoped, tag = 'input window, operand 0, single buffered']
    #allocation3 [shape = 's32[1]{0}', space=sflag, size = 0x4, scoped, tag = 'scoped memory for tpu_custom_call.1']
    #allocation4 [shape = 's32[1]{0}', space=sflag, size = 0x4, scoped, tag = 'scoped memory for tpu_custom_call.1']
    #allocation5 [shape = 'u8[512]{0}', space=vmem, size = 0x400, scoped, tag = 'output window, operand 0, single buffered']
    %7 = vsyncpa [#allocation3], 0
    %8 = vsyncpa [#allocation4], 0
    // Predicated region
    $region2: #{tpu_custom_call.1} parent=1 // pred_check
      _
    $region3: #{tpu_custom_call.1} parent=1 // pred_check_branch
      %10 = sbr.rel (0) target = $region5
    $region4: #{tpu_custom_call.1} parent=1 // pred_region
      %s12 = ssub.s32 256, 256
      %13 = vsyncadd [#allocation3], %s12
      %s14 = sshll.u32 [#allocation2], 4
      %s15 = int_to_ptr.vmem [resolvable:$true] %s14
      %20 = dma.hbm_to_vmem [thread:$0]  %s0, 256, %s15, [#allocation3], 128, 128, 8
    $region5: #{tpu_custom_call.1} parent=1 // pred_fallthru
      _
    // Predicated region
    $region6: #{tpu_custom_call.1} parent=1 // pred_check
      _
    $region7: #{tpu_custom_call.1} parent=1 // pred_check_branch
      %22 = sbr.rel (0) target = $region9
    $region8: #{tpu_custom_call.1} parent=1 // pred_region
      _
    $region9: #{tpu_custom_call.1} parent=1 // pred_fallthru
      _
    // Predicated region
    $region10: #{tpu_custom_call.1} parent=1 // pred_check
      _
    $region11: #{tpu_custom_call.1} parent=1 // pred_check_branch
      %24 = sbr.rel (0) target = $region13
    $region12: #{tpu_custom_call.1} parent=1 // pred_region
      %25 = dma.done [#allocation3], 256
    $region13: #{tpu_custom_call.1} parent=1 // pred_fallthru
      _
    %v26 = vld [vmem:[#allocation2] sm:$0x3]
    %v27 = vld [vmem:[#allocation2 + $0x2] sm:$0x3]
    %v28 = vld [vmem:[#allocation2 + $0x4] sm:$0x3]
    %v29 = vld [vmem:[#allocation2 + $0x6] sm:$0x3]
    %v30 = vld [vmem:[#allocation2 + $0x8] sm:$0x3]
    %v31 = vld [vmem:[#allocation2 + $0xa] sm:$0x1]
    %v32 = vld [vmem:[%s1] sm:$0x3]
    %34 = vset.pattern.permute.xlu0 0
    %35 = vperm.xlu0 %34, %v32
    %v36 = vpop.permute.xlu0 %35
    %v38 = vmul.f32 %v36, %v26
    %39 = vset.pattern.permute.xlu0 1
    %40 = vperm.xlu0 %39, %v32
    %v41 = vpop.permute.xlu0 %40
    %v43 = vmul.f32 %v41, %v27
    %v44 = vadd.f32 %v38, %v43
    %45 = vset.pattern.permute.xlu0 2
    %46 = vperm.xlu0 %45, %v32
    %v47 = vpop.permute.xlu0 %46
    %v49 = vmul.f32 %v47, %v28
    %v50 = vadd.f32 %v44, %v49
    %51 = vset.pattern.permute.xlu0 9
    %52 = vperm.xlu0 %51, %v32
    %v53 = vpop.permute.xlu0 %52
    %v55 = vadd.f32 %v50, %v53
    %56 = vset.pattern.permute.xlu0 3
    %57 = vperm.xlu0 %56, %v32
    %v58 = vpop.permute.xlu0 %57
    %v60 = vmul.f32 %v58, %v26
    %61 = vset.pattern.permute.xlu0 4
    %62 = vperm.xlu0 %61, %v32
    %v63 = vpop.permute.xlu0 %62
    %v65 = vmul.f32 %v63, %v27
    %v66 = vadd.f32 %v60, %v65
    %67 = vset.pattern.permute.xlu0 5
    %68 = vperm.xlu0 %67, %v32
    %v69 = vpop.permute.xlu0 %68
    %v71 = vmul.f32 %v69, %v28
    %v72 = vadd.f32 %v66, %v71
    %73 = vset.pattern.permute.xlu0 10
    %74 = vperm.xlu0 %73, %v32
    %v75 = vpop.permute.xlu0 %74
    %v77 = vadd.f32 %v72, %v75
    %78 = vset.pattern.permute.xlu0 6
    %79 = vperm.xlu0 %78, %v32
    %v80 = vpop.permute.xlu0 %79
    %v82 = vmul.f32 %v80, %v26
    %83 = vset.pattern.permute.xlu0 7
    %84 = vperm.xlu0 %83, %v32
    %v85 = vpop.permute.xlu0 %84
    %v87 = vmul.f32 %v85, %v27
    %v88 = vadd.f32 %v82, %v87
    %89 = vset.pattern.permute.xlu0 8
    %90 = vperm.xlu0 %89, %v32
    %v91 = vpop.permute.xlu0 %90
    %v93 = vmul.f32 %v91, %v28
    %v94 = vadd.f32 %v88, %v93
    %95 = vset.pattern.permute.xlu0 11
    %96 = vperm.xlu0 %95, %v32
    %v97 = vpop.permute.xlu0 %96
    %v99 = vadd.f32 %v94, %v97
    %v100 = vrcp.pop %v99
    %v101 = vmul.f32 %v55, %v100
    %102 = vset.pattern.permute.xlu0 12
    %103 = vperm.xlu0 %102, %v32
    %v104 = vpop.permute.xlu0 %103
    %v106 = vadd.f32 %v101, %v104
    %v107 = vmul.f32 %v77, %v100
    %108 = vset.pattern.permute.xlu0 13
    %109 = vperm.xlu0 %108, %v32
    %v110 = vpop.permute.xlu0 %109
    %v112 = vadd.f32 %v107, %v110
    %v113 = vsub.f32 %v29, %v106
    %v114 = vsub.f32 %v30, %v112
    %v115 = vmul.f32 %v113, %v113
    %v116 = vmul.f32 %v114, %v114
    %v117 = vadd.f32 %v115, %v116
    %v118 = vlaneseq
    %v119 = vshrl.u32 %v118, 7
    %v120 = vsub.s32 0, %v119
    %v121 = vrot.slane %v31, %v120
    %v122 = vmul.f32 %v117, %v121
    %vm123 = vcmask 123904
    %v124 = vsel %vm123, %v122, 0.0
    %125 = vadd.xlane.f32.xlu0 %v124
    %v126 = vpop.xlane.xlu0 %125
    %v127 = vrot.slane %v126, 4
    %v128 = vadd.f32 %v126, %v127
    %v129 = vrot.slane %v128, 2
    %v130 = vadd.f32 %v128, %v129
    %v131 = vrot.slane %v130, 1
    %v132 = vadd.f32 %v130, %v131
    %s133 = vtos %v132
    %v134 = vmul.f32 %v32, %v32
    %136 = vrot.lane.b32.xlu0 %v134, 114
    %v137 = vpop.permute.xlu0 %136
    %vm139 = vcmask 1024
    %v140 = vsel %vm139, %v137, 0.0
    %141 = vadd.xlane.f32.xlu0 %v140
    %v142 = vpop.xlane.xlu0 %141
    %v143 = vrot.slane %v142, 4
    %v144 = vadd.f32 %v142, %v143
    %v145 = vrot.slane %v144, 2
    %v146 = vadd.f32 %v144, %v145
    %v147 = vrot.slane %v146, 1
    %v148 = vadd.f32 %v146, %v147
    %s149 = vtos %v148
    %s150 = sadd.f32 %s133, %s149
    %v151 = vstv %s150
    %vm152 = vcmask 0
    %153 = vst.msk [vmem:[#allocation5] sm:$0x1] %vm152, %v151
    // Predicated region
    $region14: #{tpu_custom_call.1} parent=1 // pred_check
      _
    $region15: #{tpu_custom_call.1} parent=1 // pred_check_branch
      %155 = sbr.rel (0) target = $region17
    $region16: #{tpu_custom_call.1} parent=1 // pred_region
      %s157 = ssub.s32 16, 16
      %158 = vsyncadd [#allocation4], %s157
      %s160 = sshll.u32 [#allocation5], 4
      %s161 = int_to_ptr.vmem [resolvable:$true] %s160
      %163 = dma.vmem_to_hbm [thread:$0]  %s161, 16, %s2, [#allocation4]
    $region17: #{tpu_custom_call.1} parent=1 // pred_fallthru
      _
    // Predicated region
    $region18: #{tpu_custom_call.1} parent=1 // pred_check
      _
    $region19: #{tpu_custom_call.1} parent=1 // pred_check_branch
      %165 = sbr.rel (0) target = $region21
    $region20: #{tpu_custom_call.1} parent=1 // pred_region
      %166 = dma.done [#allocation4], 16
    $region21: #{tpu_custom_call.1} parent=1 // pred_fallthru
      _
    %167 = vsyncpa [#allocation3], 1
    %168 = vsyncpa [#allocation4], 1

</llo_original>
